<compile_context>
chip_gen: v7x
topology: tpu7x:2x2x1
jax: 0.10.0
libtpu: 0.0.40
codegen_flags: <defaults>
</compile_context>

<pallas_src>
import functools

import jax
import jax.numpy as jnp
from jax.experimental import pallas as pl
from jax.experimental.pallas import tpu as pltpu

LANE = 128


def _round_up(x, m):
    return ((x + m - 1) // m) * m


# ------------------------------------------------------------------ kernel ---
def _predictor_kernel(x_ref, w1_ref, b1_ref, w2_ref, b2_ref,
                      slab_ref, preds_ref, *, num_classes):
    # Preprocessing (z-score) is already folded into w1/b1 on the host.
    x = x_ref[...].astype(jnp.bfloat16)                          # [TB, D_in]

    # ---- encoder: Linear + ReLU (bf16 operands, f32 MXU accumulation) ----
    h = jnp.dot(x, w1_ref[...], preferred_element_type=jnp.float32) + b1_ref[...]
    h = jnp.maximum(h, 0.0)                                      # [TB, HP] f32

    # ---- decoder: Linear -> logits ----
    logits = jnp.dot(h.astype(jnp.bfloat16), w2_ref[...],
                     preferred_element_type=jnp.float32) + b2_ref[...]   # [TB, CP]

    cp = logits.shape[-1]
    col = jax.lax.broadcasted_iota(jnp.int32, logits.shape, 1)
    valid = col < num_classes
    masked = jnp.where(valid, logits, jnp.float32(-1e30))        # mask padded classes

    # ---- prediction module: softmax (single row-max, reused below) ----
    m = jnp.max(masked, axis=-1, keepdims=True)
    e = jnp.where(valid, jnp.exp(masked - m), 0.0)
    denom = jnp.sum(e, axis=-1, keepdims=True)
    probs = e * pl.reciprocal(denom, approx=True)                # EUP vrcp

    # ---- prediction module: argmax (first index attaining the row max) ----
    preds = jnp.min(jnp.where(masked == m, col, cp), axis=-1, keepdims=True)

    # ---- lane-dense stores ----
    slab_ref[:, :cp] = logits                                    # [TB, CP]
    slab_ref[:, cp:] = probs                                     # [TB, CP]
    preds_ref[...] = jnp.broadcast_to(preds, preds_ref.shape)    # [TB, 128] int32


def predictor_pallas(x, params, *, tile_b=512):
    """Run the fused (pre)processing + predictor + prediction-module kernel."""
    num_classes = params["num_classes"]
    B, d_in = x.shape
    hp = params["w1"].shape[1]
    cp = params["w2"].shape[1]

    # batch tiling: TB rows per grid step (multiple of 8 sublanes)
    b8 = _round_up(B, 8)
    tb = min(b8, tile_b)
    bp = _round_up(B, tb)
    if bp != B:
        x = jnp.pad(x, ((0, bp - B), (0, 0)))

    kernel = functools.partial(_predictor_kernel, num_classes=num_classes)

    slab, preds_full = pl.pallas_call(
        kernel,
        grid=(bp // tb,),
        in_specs=[
            pl.BlockSpec((tb, d_in), lambda i: (i, 0)),     # x   (tiled over batch)
            pl.BlockSpec((d_in, hp), lambda i: (0, 0)),     # w1  (VMEM-resident)
            pl.BlockSpec((1, hp),    lambda i: (0, 0)),     # b1
            pl.BlockSpec((hp, cp),   lambda i: (0, 0)),     # w2
            pl.BlockSpec((1, cp),    lambda i: (0, 0)),     # b2
        ],
        out_specs=(
            pl.BlockSpec((tb, 2 * cp), lambda i: (i, 0)),   # [logits | probs] slab
            pl.BlockSpec((tb, LANE),   lambda i: (i, 0)),   # predictions (lane-dense)
        ),
        out_shape=(
            jax.ShapeDtypeStruct((bp, 2 * cp), jnp.float32),
            jax.ShapeDtypeStruct((bp, LANE), jnp.int32),
        ),
        compiler_params=pltpu.CompilerParams(
            dimension_semantics=("parallel",),              # megacore-shard batch on v7x
        ),
    )(x, params["w1"], params["b1"], params["w2"], params["b2"])

    logits = slab[:B, :num_classes]
    probs = slab[:B, cp:cp + num_classes]
    preds = preds_full[:B, :1]
    return logits, probs, preds


# --------------------------------------------------- host-side param build ---
def build_inference_params(mean, std, w1, b1, w2, b2):
    """Fold z-score normalization into the first layer and pad to lane width."""
    d_in, h = w1.shape
    c = w2.shape[1]
    hp = _round_up(h, LANE)
    cp = _round_up(c, LANE)

    # fold: (x - mean)/std @ w1 + b1 == x @ (w1/std.T) + (b1 - (mean/std) @ w1)
    w1f = w1 / std.reshape(d_in, 1)
    b1f = b1 - (mean / std) @ w1

    # zero-pad hidden/class dims to 128-lane multiples (padded hidden units
    # stay exactly 0 through ReLU; padded classes masked in-kernel)
    w1p = jnp.zeros((d_in, hp), jnp.float32).at[:, :h].set(w1f)
    b1p = jnp.zeros((1, hp), jnp.float32).at[:, :h].set(b1f)
    w2p = jnp.zeros((hp, cp), jnp.float32).at[:h, :c].set(w2)
    b2p = jnp.zeros((1, cp), jnp.float32).at[:, :c].set(b2)

    return {
        "w1": w1p.astype(jnp.bfloat16),     # MXU operands in bf16
        "w2": w2p.astype(jnp.bfloat16),
        "b1": b1p,                          # biases stay f32 (added post-MXU)
        "b2": b2p,
        "num_classes": c,
    }


# ------------------------------------------------ InferenceModule analogue ---
class InferenceModuleJAX:
    """Mirrors Ludwig's InferenceModule: preprocessor -> predictor -> postprocessor."""

    INPUT_FEATURE = "num_in"
    OUTPUT_FEATURE = "cat_out"

    def __init__(self, params):
        self.params = params

    # preprocessor_forward is folded into the predictor kernel's first linear
    # layer (host-side algebra at param-build time), so this stage is identity.
    def preprocessor_forward(self, inputs):
        return inputs

    def predictor_forward(self, preproc_inputs):
        logits, probs, preds = predictor_pallas(
            preproc_inputs[self.INPUT_FEATURE], self.params)
        f = self.OUTPUT_FEATURE
        # flattened "<feature>::<tensor>" keys, as in _InferencePredictor
        return {
            f"{f}::logits": logits,
            f"{f}::probabilities": probs,
            f"{f}::predictions": preds,
        }

    def postprocessor_forward(self, predictions_flattened):
        # _unflatten_dict_by_feature_name equivalent (pure dict glue)
        outputs = {}
        for concat_key, tensor in predictions_flattened.items():
            feature_name, tensor_name = concat_key.split("::", 1)
            outputs.setdefault(feature_name, {})[tensor_name] = tensor
        return outputs

    def forward(self, inputs):
        preproc_inputs = self.preprocessor_forward(inputs)
        predictions_flattened = self.predictor_forward(preproc_inputs)
        return self.postprocessor_forward(predictions_flattened)

    __call__ = forward


# ---------------------------------------------------------------- reference --
def _reference_bf16(x, pp):
    """Pure-JAX reference mirroring the kernel's numerics (folded bf16 weights)."""
    c = pp["num_classes"]
    xb = x.astype(jnp.bfloat16)
    h = jnp.maximum(
        jnp.dot(xb, pp["w1"], preferred_element_type=jnp.float32) + pp["b1"], 0.0)
    logits = jnp.dot(h.astype(jnp.bfloat16), pp["w2"],
                     preferred_element_type=jnp.float32) + pp["b2"]
    logits = logits[:, :c]
    probs = jax.nn.softmax(logits, axis=-1)
    preds = jnp.argmax(logits, axis=-1).astype(jnp.int32)[:, None]
    return logits, probs, preds


def _reference_f32(x, raw):
    """Original unfolded f32 math (semantic check of the normalization fold)."""
    xn = (x - raw["mean"]) / raw["std"]
    h = jnp.maximum(xn @ raw["w1"] + raw["b1"], 0.0)
    logits = h @ raw["w2"] + raw["b2"]
    probs = jax.nn.softmax(logits, axis=-1)
    return logits, probs


# -------------------------------------------------------------------- main ---
if __name__ == "__main__":
    B, D_IN, H, C = 8, 32, 64, 16

    key = jax.random.PRNGKey(0)
    kx, k1, k2, k3, k4 = jax.random.split(key, 5)

    x = jax.random.normal(kx, (B, D_IN), dtype=jnp.float32) * 3.0 + 1.5

    raw_params = {
        "mean": jnp.full((1, D_IN), 1.5, dtype=jnp.float32),
        "std": jnp.full((1, D_IN), 3.0, dtype=jnp.float32),
        "w1": jax.random.normal(k1, (D_IN, H), dtype=jnp.float32) * 0.1,
        "b1": jax.random.normal(k2, (1, H), dtype=jnp.float32) * 0.01,
        "w2": jax.random.normal(k3, (H, C), dtype=jnp.float32) * 0.1,
        "b2": jax.random.normal(k4, (1, C), dtype=jnp.float32) * 0.01,
    }
    params = build_inference_params(**raw_params)

    module = InferenceModuleJAX(params)
    outputs = module({InferenceModuleJAX.INPUT_FEATURE: x})
    jax.block_until_ready(outputs)
    out = outputs[InferenceModuleJAX.OUTPUT_FEATURE]

    # exact-ish check against a reference with identical bf16 numerics
    ref_logits, ref_probs, ref_preds = _reference_bf16(x, params)
    assert jnp.allclose(out["logits"], ref_logits, atol=1e-3, rtol=1e-3)
    assert jnp.allclose(out["probabilities"], ref_probs, atol=2e-3, rtol=2e-3)
    assert jnp.array_equal(out["predictions"], ref_preds)

    # loose check against the original unfolded f32 pipeline (validates the
    # host-side normalization fold; differences are only bf16 weight rounding)
    f32_logits, f32_probs = _reference_f32(x, raw_params)
    assert jnp.allclose(out["logits"], f32_logits, atol=5e-2, rtol=5e-2)
    assert jnp.allclose(out["probabilities"], f32_probs, atol=5e-2)

    # TODO(synk): torch.jit.load/script-based stage loading and the pandas
    # DataFrame predict()/from_directory() glue have no Pallas equivalent.
    print("KERNEL_OK")
</pallas_src>

<mosaic_0001>
module attributes {stable_mosaic.version = 11 : i64} {
  func.func @_predictor_kernel(%arg0: i32, %arg1: memref<8x32xf32, #tpu.memory_space<vmem>>, %arg2: memref<32x128xbf16, #tpu.memory_space<vmem>>, %arg3: memref<1x128xf32, #tpu.memory_space<vmem>>, %arg4: memref<128x128xbf16, #tpu.memory_space<vmem>>, %arg5: memref<1x128xf32, #tpu.memory_space<vmem>>, %arg6: memref<8x256xf32, #tpu.memory_space<vmem>>, %arg7: memref<8x128xi32, #tpu.memory_space<vmem>>) attributes {dimension_semantics = [#tpu.dimension_semantics<parallel>], iteration_bounds = array<i64: 1>, scalar_prefetch = 0 : i64, scratch_operands = 0 : i64, tpu.core_type = #tpu.core_type<tc>, window_params = [{transform_indices = @transform_0, window_bounds = array<i64: 8, 32>}, {pipeline_mode = #tpu.pipeline_mode<synchronous>, transform_indices = @transform_1, window_bounds = array<i64: 32, 128>}, {pipeline_mode = #tpu.pipeline_mode<synchronous>, transform_indices = @transform_2, window_bounds = array<i64: 1, 128>}, {pipeline_mode = #tpu.pipeline_mode<synchronous>, transform_indices = @transform_3, window_bounds = array<i64: 128, 128>}, {pipeline_mode = #tpu.pipeline_mode<synchronous>, transform_indices = @transform_4, window_bounds = array<i64: 1, 128>}, {transform_indices = @transform_5, window_bounds = array<i64: 8, 256>}, {transform_indices = @transform_6, window_bounds = array<i64: 8, 128>}]} {
    %c0 = arith.constant 0 : index
    %c0_0 = arith.constant 0 : index
    %0 = vector.load %arg1[%c0, %c0_0] : memref<8x32xf32, #tpu.memory_space<vmem>>, vector<8x32xf32>
    %1 = arith.truncf %0 : vector<8x32xf32> to vector<8x32xbf16>
    %c0_1 = arith.constant 0 : index
    %c0_2 = arith.constant 0 : index
    %2 = vector.load %arg2[%c0_1, %c0_2] : memref<32x128xbf16, #tpu.memory_space<vmem>>, vector<32x128xbf16>
    %cst = arith.constant dense<0.000000e+00> : vector<8x128xf32>
    %3 = tpu.matmul %1, %2, %cst {dimension_numbers = #tpu.dot_dimension_numbers<[1], [0], [0], [1], [0, 0, 1, 1], [], []>} : vector<8x32xbf16>, vector<32x128xbf16>, vector<8x128xf32> -> vector<8x128xf32>
    %c0_3 = arith.constant 0 : index
    %c0_4 = arith.constant 0 : index
    %4 = vector.load %arg3[%c0_3, %c0_4] : memref<1x128xf32, #tpu.memory_space<vmem>>, vector<1x128xf32>
    %5 = vector.broadcast %4 : vector<1x128xf32> to vector<8x128xf32>
    %6 = arith.addf %3, %5 : vector<8x128xf32>
    %cst_5 = arith.constant 0.000000e+00 : f32
    %7 = vector.broadcast %cst_5 : f32 to vector<8x128xf32>
    %8 = arith.maximumf %6, %7 : vector<8x128xf32>
    %9 = arith.truncf %8 : vector<8x128xf32> to vector<8x128xbf16>
    %c0_6 = arith.constant 0 : index
    %c0_7 = arith.constant 0 : index
    %10 = vector.load %arg4[%c0_6, %c0_7] : memref<128x128xbf16, #tpu.memory_space<vmem>>, vector<128x128xbf16>
    %cst_8 = arith.constant dense<0.000000e+00> : vector<8x128xf32>
    %11 = tpu.matmul %9, %10, %cst_8 {dimension_numbers = #tpu.dot_dimension_numbers<[1], [0], [0], [1], [0, 0, 1, 1], [], []>} : vector<8x128xbf16>, vector<128x128xbf16>, vector<8x128xf32> -> vector<8x128xf32>
    %c0_9 = arith.constant 0 : index
    %c0_10 = arith.constant 0 : index
    %12 = vector.load %arg5[%c0_9, %c0_10] : memref<1x128xf32, #tpu.memory_space<vmem>>, vector<1x128xf32>
    %13 = vector.broadcast %12 : vector<1x128xf32> to vector<8x128xf32>
    %14 = arith.addf %11, %13 : vector<8x128xf32>
    %15 = tpu.iota {dimensions = array<i32: 1>} : vector<8x128xi32>
    %c16_i32 = arith.constant 16 : i32
    %16 = vector.broadcast %c16_i32 : i32 to vector<8x128xi32>
    %17 = arith.cmpi slt, %15, %16 : vector<8x128xi32>
    %cst_11 = arith.constant -1.000000e+30 : f32
    %18 = vector.broadcast %cst_11 : f32 to vector<8x128xf32>
    %19 = arith.select %17, %14, %18 : vector<8x128xi1>, vector<8x128xf32>
    %cst_12 = arith.constant dense<0xFF800000> : vector<8xf32>
    %20 = vector.multi_reduction <maximumf>, %19, %cst_12 [1] : vector<8x128xf32> to vector<8xf32>
    %21 = vector.shape_cast %20 : vector<8xf32> to vector<8x1xf32>
    %22 = vector.broadcast %21 : vector<8x1xf32> to vector<8x128xf32>
    %23 = arith.subf %19, %22 : vector<8x128xf32>
    %24 = math.exp %23 : vector<8x128xf32>
    %cst_13 = arith.constant 0.000000e+00 : f32
    %25 = vector.broadcast %cst_13 : f32 to vector<8x128xf32>
    %26 = arith.select %17, %24, %25 : vector<8x128xi1>, vector<8x128xf32>
    %cst_14 = arith.constant dense<0.000000e+00> : vector<8xf32>
    %27 = vector.multi_reduction <add>, %26, %cst_14 [1] : vector<8x128xf32> to vector<8xf32>
    %28 = vector.shape_cast %27 : vector<8xf32> to vector<8x1xf32>
    %29 = tpu.reciprocal %28 {approx = true} : vector<8x1xf32> -> vector<8x1xf32>
    %30 = vector.broadcast %29 : vector<8x1xf32> to vector<8x128xf32>
    %31 = arith.mulf %26, %30 : vector<8x128xf32>
    %32 = vector.broadcast %21 : vector<8x1xf32> to vector<8x128xf32>
    %33 = arith.cmpf oeq, %19, %32 : vector<8x128xf32>
    %c128_i32 = arith.constant 128 : i32
    %34 = vector.broadcast %c128_i32 : i32 to vector<8x128xi32>
    %35 = arith.select %33, %15, %34 : vector<8x128xi1>, vector<8x128xi32>
    %cst_15 = arith.constant dense<2147483647> : vector<8xi32>
    %36 = vector.multi_reduction <minsi>, %35, %cst_15 [1] : vector<8x128xi32> to vector<8xi32>
    %37 = vector.shape_cast %36 : vector<8xi32> to vector<8x1xi32>
    %c0_16 = arith.constant 0 : index
    %c0_17 = arith.constant 0 : index
    %38 = vector.load %arg6[%c0_16, %c0_17] : memref<8x256xf32, #tpu.memory_space<vmem>>, vector<8x128xf32>
    tpu.vector_store %arg6[%c0_16, %c0_17], %14 {strides = array<i32>} : memref<8x256xf32, #tpu.memory_space<vmem>>, vector<8x128xf32>,
    %c0_18 = arith.constant 0 : index
    %c128 = arith.constant 128 : index
    %39 = vector.load %arg6[%c0_18, %c128] : memref<8x256xf32, #tpu.memory_space<vmem>>, vector<8x128xf32>
    tpu.vector_store %arg6[%c0_18, %c128], %31 {strides = array<i32>} : memref<8x256xf32, #tpu.memory_space<vmem>>, vector<8x128xf32>,
    %40 = vector.shape_cast %37 : vector<8x1xi32> to vector<8x1xi32>
    %41 = vector.broadcast %40 : vector<8x1xi32> to vector<8x128xi32>
    %c0_19 = arith.constant 0 : index
    %c0_20 = arith.constant 0 : index
    %42 = vector.load %arg7[%c0_19, %c0_20] : memref<8x128xi32, #tpu.memory_space<vmem>>, vector<8x128xi32>
    tpu.vector_store %arg7[%c0_19, %c0_20], %41 {strides = array<i32>} : memref<8x128xi32, #tpu.memory_space<vmem>>, vector<8x128xi32>,
    return
  }
  func.func @transform_0(%arg0: i32) -> (i32, i32) {
    %c0_i32 = arith.constant 0 : i32
    %c0_i32_0 = arith.constant 0 : i32
    return %arg0, %c0_i32 : i32, i32
  }
  func.func @transform_1(%arg0: i32) -> (i32, i32) {
    %c0_i32 = arith.constant 0 : i32
    %c0_i32_0 = arith.constant 0 : i32
    %c0_i32_1 = arith.constant 0 : i32
    return %c0_i32, %c0_i32_0 : i32, i32
  }
  func.func @transform_2(%arg0: i32) -> (i32, i32) {
    %c0_i32 = arith.constant 0 : i32
    %c0_i32_0 = arith.constant 0 : i32
    %c0_i32_1 = arith.constant 0 : i32
    return %c0_i32, %c0_i32_0 : i32, i32
  }
  func.func @transform_3(%arg0: i32) -> (i32, i32) {
    %c0_i32 = arith.constant 0 : i32
    %c0_i32_0 = arith.constant 0 : i32
    %c0_i32_1 = arith.constant 0 : i32
    return %c0_i32, %c0_i32_0 : i32, i32
  }
  func.func @transform_4(%arg0: i32) -> (i32, i32) {
    %c0_i32 = arith.constant 0 : i32
    %c0_i32_0 = arith.constant 0 : i32
    %c0_i32_1 = arith.constant 0 : i32
    return %c0_i32, %c0_i32_0 : i32, i32
  }
  func.func @transform_5(%arg0: i32) -> (i32, i32) {
    %c0_i32 = arith.constant 0 : i32
    %c0_i32_0 = arith.constant 0 : i32
    return %arg0, %c0_i32 : i32, i32
  }
  func.func @transform_6(%arg0: i32) -> (i32, i32) {
    %c0_i32 = arith.constant 0 : i32
    %c0_i32_0 = arith.constant 0 : i32
    return %arg0, %c0_i32 : i32, i32
  }
}

</mosaic_0001>

<llo_original>
// kernel: tpu_custom_call.1
$region0: #{tpu_custom_call.1}
  #allocation0 [shape = 'u32[]', space=smem, size = 0x4, offset = 0x4, fixed_abs, tag = 'smem constant byte address 0x4 - core index']
  #allocation1 [shape = 'u32[144,128]{1,0:T(1,128)}', space=vmem, size = 0x12000, scoped, tag = 'internal scratch']
  %s0 = inlined_call_operand.hbm [shape: f32[8,32], index: 0, kind: input, shape index: {}]
  %s1 = inlined_call_operand.hbm [shape: bf16[32,128], index: 1, kind: input, shape index: {}]
  %s2 = inlined_call_operand.vmem [shape: f32[1,128], index: 2, kind: input, shape index: {}]
  %s3 = inlined_call_operand.hbm [shape: bf16[128,128], index: 3, kind: input, shape index: {}]
  %s4 = inlined_call_operand.vmem [shape: f32[1,128], index: 4, kind: input, shape index: {}]
  %s5 = inlined_call_operand.hbm [shape: f32[8,256], index: 5, kind: output, shape index: {0}]
  %s6 = inlined_call_operand.hbm [shape: s32[8,128], index: 6, kind: output, shape index: {1}]
  %7 = xla_tuple %s5, %s6
  %s8 = sld [smem:[#allocation0]]
  $region50: #{tpu_custom_call.1} parent=0
    _
  %s10 = ssub.s32 1, %s8
  %s11 = scalar_select 0, %s10, %s8
  $region1: #{tpu_custom_call.1} parent=0
    #allocation2 [shape = 'u8[4096]{0}', space=vmem, size = 0x1000, scoped, tag = 'input window, operand 0, single buffered']
    #allocation3 [shape = 's32[1]{0}', space=sflag, size = 0x4, scoped, tag = 'scoped memory for tpu_custom_call.1']
    #allocation4 [shape = 's32[1]{0}', space=sflag, size = 0x4, scoped, tag = 'scoped memory for tpu_custom_call.1']
    #allocation5 [shape = 'u8[8192]{0}', space=vmem, size = 0x2000, scoped, tag = 'input window, operand 1, single buffered']
    #allocation6 [shape = 's32[1]{0}', space=sflag, size = 0x4, scoped, tag = 'scoped memory for tpu_custom_call.1']
    #allocation7 [shape = 'u8[32768]{0}', space=vmem, size = 0x8000, scoped, tag = 'input window, operand 3, single buffered']
    #allocation8 [shape = 'u8[8192]{0}', space=vmem, size = 0x2000, scoped, tag = 'output window, operand 0, single buffered']
    #allocation9 [shape = 'u8[4096]{0}', space=vmem, size = 0x1000, scoped, tag = 'output window, operand 1, single buffered']
    #allocation10 [shape = 's32[1]{0}', space=sflag, size = 0x4, scoped, tag = 'scoped memory for tpu_custom_call.1']
    %12 = vsyncpa [#allocation3], 0
    %13 = vsyncpa [#allocation6], 0
    %14 = vsyncpa [#allocation4], 0
    %15 = vsyncpa [#allocation10], 0
    // Predicated region
    $region2: #{tpu_custom_call.1} parent=1 // pred_check
      _
    $region3: #{tpu_custom_call.1} parent=1 // pred_check_branch
      %17 = sbr.rel (0) target = $region5
    $region4: #{tpu_custom_call.1} parent=1 // pred_region
      %s19 = ssub.s32 128, 128
      %20 = vsyncadd [#allocation3], %s19
      %s22 = sshll.u32 [#allocation2], 4
      %s23 = int_to_ptr.vmem [resolvable:$true] %s22
      %25 = dma.hbm_to_vmem [thread:$0]  %s0, 128, %s23, [#allocation3]
    $region5: #{tpu_custom_call.1} parent=1 // pred_fallthru
      _
    // Predicated region
    $region6: #{tpu_custom_call.1} parent=1 // pred_check
      _
    $region7: #{tpu_custom_call.1} parent=1 // pred_check_branch
      %27 = sbr.rel (0) target = $region9
    $region8: #{tpu_custom_call.1} parent=1 // pred_region
      %s29 = ssub.s32 256, 256
      %30 = vsyncadd [#allocation6], %s29
      %s31 = sshll.u32 [#allocation5], 4
      %s32 = int_to_ptr.vmem [resolvable:$true] %s31
      %37 = dma.hbm_to_vmem [thread:$0]  %s1, 256, %s32, [#allocation6], 64, 64, 4
    $region9: #{tpu_custom_call.1} parent=1 // pred_fallthru
      _
    // Predicated region
    $region10: #{tpu_custom_call.1} parent=1 // pred_check
      _
    $region11: #{tpu_custom_call.1} parent=1 // pred_check_branch
      %39 = sbr.rel (0) target = $region13
    $region12: #{tpu_custom_call.1} parent=1 // pred_region
      _
    $region13: #{tpu_custom_call.1} parent=1 // pred_fallthru
      _
    // Predicated region
    $region14: #{tpu_custom_call.1} parent=1 // pred_check
      _
    $region15: #{tpu_custom_call.1} parent=1 // pred_check_branch
      %41 = sbr.rel (0) target = $region17
    $region16: #{tpu_custom_call.1} parent=1 // pred_region
      %s43 = ssub.s32 1024, 1024
      %44 = vsyncadd [#allocation6], %s43
      %s45 = sshll.u32 [#allocation7], 4
      %s46 = int_to_ptr.vmem [resolvable:$true] %s45
      %51 = dma.hbm_to_vmem [thread:$0]  %s3, 1024, %s46, [#allocation6], 64, 64, 4
    $region17: #{tpu_custom_call.1} parent=1 // pred_fallthru
      _
    // Predicated region
    $region18: #{tpu_custom_call.1} parent=1 // pred_check
      _
    $region19: #{tpu_custom_call.1} parent=1 // pred_check_branch
      %53 = sbr.rel (0) target = $region21
    $region20: #{tpu_custom_call.1} parent=1 // pred_region
      _
    $region21: #{tpu_custom_call.1} parent=1 // pred_fallthru
      _
    // Predicated region
    $region22: #{tpu_custom_call.1} parent=1 // pred_check
      _
    $region23: #{tpu_custom_call.1} parent=1 // pred_check_branch
      %55 = sbr.rel (0) target = $region25
    $region24: #{tpu_custom_call.1} parent=1 // pred_region
      %56 = dma.done [#allocation3], 128
    $region25: #{tpu_custom_call.1} parent=1 // pred_fallthru
      _
    // Predicated region
    $region26: #{tpu_custom_call.1} parent=1 // pred_check
      _
    $region27: #{tpu_custom_call.1} parent=1 // pred_check_branch
      %58 = sbr.rel (0) target = $region29
    $region28: #{tpu_custom_call.1} parent=1 // pred_region
      %59 = dma.done [#allocation6], 256
    $region29: #{tpu_custom_call.1} parent=1 // pred_fallthru
      _
    // Predicated region
    $region30: #{tpu_custom_call.1} parent=1 // pred_check
      _
    $region31: #{tpu_custom_call.1} parent=1 // pred_check_branch
      %61 = sbr.rel (0) target = $region33
    $region32: #{tpu_custom_call.1} parent=1 // pred_region
      %62 = dma.done [#allocation6], 1024
    $region33: #{tpu_custom_call.1} parent=1 // pred_fallthru
      _
    %v64 = vld [vmem:[#allocation2] sm:$0xff]
    %v65 = vpack.c.bf16 %v64, %v64
    %v66 = vld [vmem:[#allocation5] sm:$0xf]
    %v67 = vld [vmem:[#allocation5 + $0x4] sm:$0xf]
    %v68 = vld [vmem:[#allocation5 + $0x8] sm:$0xf]
    %v69 = vld [vmem:[#allocation5 + $0xc] sm:$0xf]
    %v70 = vld [vmem:[%s2] sm:$0x1]
    %v72 = vlaneseq
    %v73 = vshrl.u32 %v72, 7
    %v74 = vsub.s32 0, %v73
    %v75 = vrot.slane %v70, %v74
    %v81 = vunpack.c.l.b16 %v66
    %v82 = vunpack.c.l.b16 %v67
    %v83 = vunpack.c.l.b16 %v68
    %v84 = vunpack.c.l.b16 %v69
    %v85 = vpack.c.b16 %v82, %v81
    %v86 = vpack.c.b16 %v84, %v83
    %vm89 = vcmask 261120
    %v91 = vsel %vm89, %v65, 0
    %93 = vmatprep.subr.bf16.mxu0 0
    %94 = vmatpush1.bf16.msra.mxu0 %v85
    %95 = vmatprep.subr.bf16.mxu0 0
    %96 = vmatpush1.bf16.msra.mxu0 %v86
    %97 = vmatprep.subr.bf16.mxu0 0
    %98 = vmatpush1.bf16.msra.mxu0 0
    %99 = vmatprep.subr.bf16.mxu0 0
    %100 = vmatpush1.bf16.msra.mxu0 0
    %101 = vmatprep.subr.bf16.mxu0 0
    %102 = vmatpush1.bf16.msra.mxu0 0
    %103 = vmatprep.subr.bf16.mxu0 0
    %104 = vmatpush1.bf16.msra.mxu0 0
    %105 = vmatprep.subr.bf16.mxu0 0
    %106 = vmatpush1.bf16.msra.mxu0 0
    %107 = vmatprep.subr.bf16.mxu0 0
    %108 = vmatpush1.bf16.msra.mxu0 0
    %109 = vmatprep.subr.bf16.mxu0 0
    %110 = vmatpush1.bf16.msra.mxu0 0
    %111 = vmatprep.subr.bf16.mxu0 0
    %112 = vmatpush1.bf16.msra.mxu0 0
    %113 = vmatprep.subr.bf16.mxu0 0
    %114 = vmatpush1.bf16.msra.mxu0 0
    %115 = vmatprep.subr.bf16.mxu0 0
    %116 = vmatpush1.bf16.msra.mxu0 0
    %117 = vmatprep.subr.bf16.mxu0 0
    %118 = vmatpush1.bf16.msra.mxu0 0
    %119 = vmatprep.subr.bf16.mxu0 0
    %120 = vmatpush1.bf16.msra.mxu0 0
    %121 = vmatprep.subr.bf16.mxu0 0
    %122 = vmatpush1.bf16.msra.mxu0 0
    %123 = vmatprep.subr.bf16.mxu0 0
    %124 = vmatpush1.bf16.msra.mxu0 0
    %125 = vmatprep.mubr.bf16.mxu0 0
    %126 = vmatmul.mubr.bf16.gmra.mrb[0].mxu0 %v91
    %v127 = vpop.f32.mrb[0].mxu0
    %v128 = vadd.f32 %v75, %v127
    %v129 = vpop.f32.mrb[0].mxu0
    %v130 = vpop.f32.mrb[0].mxu0
    %v131 = vpop.f32.mrb[0].mxu0
    %132 = vdwg.mxu0
    %v133 = vmax.f32 %v128, 0.0
    %v134 = vpack.c.bf16 %v133, %v133
    %v135 = vld [vmem:[#allocation7] sm:$0xf]
    %v136 = vld [vmem:[#allocation7 + $0x4] sm:$0xf]
    %v137 = vld [vmem:[#allocation7 + $0x8] sm:$0xf]
    %v138 = vld [vmem:[#allocation7 + $0xc] sm:$0xf]
    %v139 = vld [vmem:[#allocation7 + $0x10] sm:$0xf]
    %v140 = vld [vmem:[#allocation7 + $0x14] sm:$0xf]
    %v141 = vld [vmem:[#allocation7 + $0x18] sm:$0xf]
    %v142 = vld [vmem:[#allocation7 + $0x1c] sm:$0xf]
    %v143 = vld [vmem:[#allocation7 + $0x20] sm:$0xf]
    %v144 = vld [vmem:[#allocation7 + $0x24] sm:$0xf]
    %v145 = vld [vmem:[#allocation7 + $0x28] sm:$0xf]
    %v146 = vld [vmem:[#allocation7 + $0x2c] sm:$0xf]
    %v147 = vld [vmem:[#allocation7 + $0x30] sm:$0xf]
    %v148 = vld [vmem:[#allocation7 + $0x34] sm:$0xf]
    %v149 = vld [vmem:[#allocation7 + $0x38] sm:$0xf]
    %v150 = vld [vmem:[#allocation7 + $0x3c] sm:$0xf]
    %v151 = vld [vmem:[%s4] sm:$0x1]
    %v153 = vlaneseq
    %v154 = vshrl.u32 %v153, 7
    %v155 = vsub.s32 0, %v154
    %v156 = vrot.slane %v151, %v155
    %v174 = vunpack.c.l.b16 %v135
    %v175 = vunpack.c.l.b16 %v136
    %v176 = vunpack.c.l.b16 %v137
    %v177 = vunpack.c.l.b16 %v138
    %v178 = vunpack.c.l.b16 %v139
    %v179 = vunpack.c.l.b16 %v140
    %v180 = vunpack.c.l.b16 %v141
    %v181 = vunpack.c.l.b16 %v142
    %v182 = vunpack.c.l.b16 %v143
    %v183 = vunpack.c.l.b16 %v144
    %v184 = vunpack.c.l.b16 %v145
    %v185 = vunpack.c.l.b16 %v146
    %v186 = vunpack.c.l.b16 %v147
    %v187 = vunpack.c.l.b16 %v148
    %v188 = vunpack.c.l.b16 %v149
    %v189 = vunpack.c.l.b16 %v150
    %v190 = vpack.c.b16 %v175, %v174
    %v191 = vpack.c.b16 %v177, %v176
    %v192 = vpack.c.b16 %v179, %v178
    %v193 = vpack.c.b16 %v181, %v180
    %v194 = vpack.c.b16 %v183, %v182
    %v195 = vpack.c.b16 %v185, %v184
    %v196 = vpack.c.b16 %v187, %v186
    %v197 = vpack.c.b16 %v189, %v188
    %206 = vmatprep.subr.bf16.mxu0 0
    %207 = vmatpush1.bf16.msra.mxu0 %v190
    %208 = vmatprep.subr.bf16.mxu0 0
    %209 = vmatpush1.bf16.msra.mxu0 %v191
    %210 = vmatprep.subr.bf16.mxu0 0
    %211 = vmatpush1.bf16.msra.mxu0 %v192
    %212 = vmatprep.subr.bf16.mxu0 0
    %213 = vmatpush1.bf16.msra.mxu0 %v193
    %214 = vmatprep.subr.bf16.mxu0 0
    %215 = vmatpush1.bf16.msra.mxu0 %v194
    %216 = vmatprep.subr.bf16.mxu0 0
    %217 = vmatpush1.bf16.msra.mxu0 %v195
    %218 = vmatprep.subr.bf16.mxu0 0
    %219 = vmatpush1.bf16.msra.mxu0 %v196
    %220 = vmatprep.subr.bf16.mxu0 0
    %221 = vmatpush1.bf16.msra.mxu0 %v197
    %222 = vmatprep.subr.bf16.mxu0 0
    %223 = vmatpush1.bf16.msra.mxu0 0
    %224 = vmatprep.subr.bf16.mxu0 0
    %225 = vmatpush1.bf16.msra.mxu0 0
    %226 = vmatprep.subr.bf16.mxu0 0
    %227 = vmatpush1.bf16.msra.mxu0 0
    %228 = vmatprep.subr.bf16.mxu0 0
    %229 = vmatpush1.bf16.msra.mxu0 0
    %230 = vmatprep.subr.bf16.mxu0 0
    %231 = vmatpush1.bf16.msra.mxu0 0
    %232 = vmatprep.subr.bf16.mxu0 0
    %233 = vmatpush1.bf16.msra.mxu0 0
    %234 = vmatprep.subr.bf16.mxu0 0
    %235 = vmatpush1.bf16.msra.mxu0 0
    %236 = vmatprep.subr.bf16.mxu0 0
    %237 = vmatpush1.bf16.msra.mxu0 0
    %238 = vmatprep.mubr.bf16.mxu0 0
    %239 = vmatmul.mubr.bf16.gmra.mrb[0].mxu0 %v134
    %v240 = vpop.f32.mrb[0].mxu0
    %v241 = vadd.f32 %v156, %v240
    %v242 = vpop.f32.mrb[0].mxu0
    %v243 = vpop.f32.mrb[0].mxu0
    %v244 = vpop.f32.mrb[0].mxu0
    %245 = vdwg.mxu0
    %v246 = vlaneseq
    %v247 = vand.u32 %v246, 127
    %vm248 = vcmp.lt.s32.totalorder %v247, 16
    %v249 = vsel %vm248, %v241, -1e+30
    %250 = vmax.xlane.f32.xlu0 %v249
    %v251 = vpop.xlane.xlu0 %250
    %v252 = vsub.f32 %v249, %v251
    %v253 = vmul.f32 %v252, 1.442695
    %v254 = vpow.pop %v253
    %v255 = vsel %vm248, %v254, 0.0
    %256 = vadd.xlane.f32.xlu0 %v255
    %v257 = vpop.xlane.xlu0 %256
    %v258 = vrcp.pop %v257
    %v259 = vmul.f32 %v255, %v258
    %vm260 = vcmp.eq.f32.partialorder %v249, %v251
    %v261 = vsel %vm260, %v247, 128
    %v262 = vand.u32 %v261, 65535
    %v263 = vshra.s32 %v261, 16
    %v264 = vcvt.s32.f32 %v262
    %v265 = vcvt.s32.f32 %v263
    %266 = vmin.xlane.f32.xlu0 %v265
    %v267 = vpop.xlane.xlu0 %266
    %vm268 = vcmp.eq.f32.partialorder %v265, %v267
    %v269 = vsel %vm268, %v264, inf
    %270 = vmin.xlane.f32.xlu0 %v269
    %v271 = vpop.xlane.xlu0 %270
    %v272 = vcvt.f32.s32 %v271
    %v273 = vcvt.f32.s32 %v267
    %v274 = vshll.u32 %v273, 16
    %v275 = vadd.s32 %v274, %v272
    %276 = vst [vmem:[#allocation8] sm:$0xff] %v241
    %277 = vst [vmem:[#allocation8 + $0x8] sm:$0xff] %v259
    %278 = vst [vmem:[#allocation9] sm:$0xff] %v275
    // Predicated region
    $region34: #{tpu_custom_call.1} parent=1 // pred_check
      _
    $region35: #{tpu_custom_call.1} parent=1 // pred_check_branch
      %280 = sbr.rel (0) target = $region37
    $region36: #{tpu_custom_call.1} parent=1 // pred_region
      %s282 = ssub.s32 256, 256
      %283 = vsyncadd [#allocation4], %s282
      %s285 = sshll.u32 [#allocation8], 4
      %s286 = int_to_ptr.vmem [resolvable:$true] %s285
      %288 = dma.vmem_to_hbm [thread:$0]  %s286, 256, %s5, [#allocation4]
    $region37: #{tpu_custom_call.1} parent=1 // pred_fallthru
      _
    // Predicated region
    $region38: #{tpu_custom_call.1} parent=1 // pred_check
      _
    $region39: #{tpu_custom_call.1} parent=1 // pred_check_branch
      %290 = sbr.rel (0) target = $region41
    $region40: #{tpu_custom_call.1} parent=1 // pred_region
      %s292 = ssub.s32 128, 128
      %293 = vsyncadd [#allocation10], %s292
      %s295 = sshll.u32 [#allocation9], 4
      %s296 = int_to_ptr.vmem [resolvable:$true] %s295
      %298 = dma.vmem_to_hbm [thread:$0]  %s296, 128, %s6, [#allocation10]
    $region41: #{tpu_custom_call.1} parent=1 // pred_fallthru
      _
    // Predicated region
    $region42: #{tpu_custom_call.1} parent=1 // pred_check
      _
    $region43: #{tpu_custom_call.1} parent=1 // pred_check_branch
      %300 = sbr.rel (0) target = $region45
    $region44: #{tpu_custom_call.1} parent=1 // pred_region
      %301 = dma.done [#allocation4], 256
    $region45: #{tpu_custom_call.1} parent=1 // pred_fallthru
      _
    // Predicated region
    $region46: #{tpu_custom_call.1} parent=1 // pred_check
      _
    $region47: #{tpu_custom_call.1} parent=1 // pred_check_branch
      %303 = sbr.rel (0) target = $region49
    $region48: #{tpu_custom_call.1} parent=1 // pred_region
      %304 = dma.done [#allocation10], 128
    $region49: #{tpu_custom_call.1} parent=1 // pred_fallthru
      _
    %305 = vsyncpa [#allocation3], 1
    %306 = vsyncpa [#allocation6], 1
    %307 = vsyncpa [#allocation4], 1
    %308 = vsyncpa [#allocation10], 1

</llo_original>
